<compile_context>
chip_gen: v6e
topology: v6e:2x2x1
jax: 0.10.0
libtpu: 0.0.40
codegen_flags: <defaults>
</compile_context>

<pallas_src>
import functools

import jax
import jax.numpy as jnp
from jax.experimental import pallas as pl
from jax.experimental.pallas import tpu as pltpu


def attention_kernel(ann_ref, hid_ref, wa_ref, wh_ref, b_ref, wo_ref,
                     ctx_ref, attw_ref, *, seq_len, matmul_dtype):
    # ann_ref : (TB, S, Din)   hid_ref : (TB, H)
    # wa_ref  : (Din, H)       wh_ref  : (H, H)
    # b_ref   : (1, H)  (= ba + bh)     wo_ref : (1, H)
    # ctx_ref : (TB, Din)      attw_ref: (TB, S)
    TB, S, Din = ann_ref.shape
    H = hid_ref.shape[1]

    prec = jax.lax.Precision.HIGHEST if matmul_dtype == jnp.float32 else None

    ann = ann_ref[...]                                            # [TB, S, Din] f32
    hid = hid_ref[...]                                            # [TB, H]     f32

    # Hidden projection: one tiny [TB, H] matmul per block, both biases fused.
    hproj = jnp.dot(hid.astype(matmul_dtype), wh_ref[...].astype(matmul_dtype),
                    preferred_element_type=jnp.float32,
                    precision=prec) + b_ref[...]                  # [TB, H]

    # Annotation projection: M = TB*S rows on the MXU (S is 8-aligned so the
    # (TB, S) collapse is layout-preserving).
    ann2 = ann.reshape(TB * S, Din)
    enc = jnp.dot(ann2.astype(matmul_dtype), wa_ref[...].astype(matmul_dtype),
                  preferred_element_type=jnp.float32,
                  precision=prec).reshape(TB, S, H)               # [TB, S, H]

    t = jnp.tanh(enc + hproj[:, None, :])                         # [TB, S, H]
    # TODO(synk): Dropout(0.25) implemented as inference-mode identity (no RNG mask).

    # `out` projection (H -> 1) on the VPU/XLU: multiply + lane reduce.
    # Keep scores as [TB, S, 1] (S in the sublane axis) so the softmax and the
    # weighted sum over S reuse this layout without extra relayouts.
    scores = jnp.sum(t * wo_ref[...].reshape(1, 1, H),
                     axis=-1, keepdims=True)                      # [TB, S, 1]

    if seq_len < S:  # static padding mask for the S -> multiple-of-8 pad
        pos = jax.lax.broadcasted_iota(jnp.int32, (TB, S, 1), 1)
        scores = jnp.where(pos < seq_len, scores, -1e30)

    # Softmax over the sequence (sublane) axis; exact divide.
    m = jnp.max(scores, axis=1, keepdims=True)                    # [TB, 1, 1]
    e = jnp.exp(scores - m)
    w3 = e / jnp.sum(e, axis=1, keepdims=True)                    # [TB, S, 1]

    # Weighted sum of annotation vectors over S (same layout as ann).
    ctx_ref[...] = jnp.sum(w3 * ann, axis=1)                      # [TB, Din]
    # Single relayout: lane-dense attention-weight store.
    attw_ref[...] = w3[:, :, 0]                                   # [TB, S]


def _choose_tb(B, S, Din, H, vmem_budget_bytes=32 * 1024 * 1024):
    """Pick the per-grid-step batch tile TB.

    Per-block resident f32 bytes ~ ann tile + enc/t activations + scores/hid,
    times 2 for Pallas' input double-buffering. Aim for a flattened matmul
    M = TB*S >= 128 (fill the MXU sublane direction) but never exceed the
    VMEM budget (sized for v7x's 64 MiB part) or B. Partial-batch blocks keep
    TB 8-aligned so the (TB, ...) second-to-last block dims stay legal.
    """
    per_row = 4 * (S * Din + 2 * S * H + 2 * S + 2 * H) * 2
    tb = max(1, vmem_budget_bytes // per_row)
    tb = max(tb, (128 + S - 1) // S)          # fill the MXU M dimension
    tb = min(tb, B)
    if tb < B:
        tb = max(8, (tb // 8) * 8)            # sublane alignment for partial blocks
        tb = min(tb, B)
    return int(tb)


def prepare_params(params):
    """Hoist the (cheap) parameter fusion out of the per-call path.

    bo is dropped: softmax is shift-invariant and raw scores are never output.
    """
    H = params["wh"].shape[1]
    return {
        "wa": params["wa"],                                   # [Din, H]
        "wh": params["wh"],                                   # [H, H]
        "b": (params["ba"] + params["bh"]).reshape(1, H),     # [1, H]
        "wo": params["wo"].reshape(1, H),                     # [1, H]
    }


def attention_model(annotations, hidden_state, fused_params, *,
                    matmul_dtype=jnp.bfloat16, tb=None):
    """annotations: [B, S, Din] f32, hidden_state: [B, H] f32
       -> (context [B, Din], attention weights [B, S])."""
    B, S, Din = annotations.shape
    H = hidden_state.shape[1]

    # Pad S to a multiple of 8 so reshapes in the kernel are layout-preserving.
    S_pad = ((S + 7) // 8) * 8
    if S_pad != S:
        annotations = jnp.pad(annotations, ((0, 0), (0, S_pad - S), (0, 0)))

    TB = tb if tb is not None else _choose_tb(B, S_pad, Din, H)
    grid = (pl.cdiv(B, TB),)

    kernel = functools.partial(attention_kernel,
                               seq_len=S, matmul_dtype=matmul_dtype)

    ctx, w = pl.pallas_call(
        kernel,
        out_shape=(jax.ShapeDtypeStruct((B, Din), jnp.float32),
                   jax.ShapeDtypeStruct((B, S_pad), jnp.float32)),
        grid=grid,
        in_specs=[
            pl.BlockSpec((TB, S_pad, Din), lambda b: (b, 0, 0)),   # annotations
            pl.BlockSpec((TB, H), lambda b: (b, 0)),               # hidden state
            pl.BlockSpec((Din, H), lambda b: (0, 0)),              # wa
            pl.BlockSpec((H, H), lambda b: (0, 0)),                # wh
            pl.BlockSpec((1, H), lambda b: (0, 0)),                # ba + bh
            pl.BlockSpec((1, H), lambda b: (0, 0)),                # wo
        ],
        out_specs=(
            pl.BlockSpec((TB, Din), lambda b: (b, 0)),             # context
            pl.BlockSpec((TB, S_pad), lambda b: (b, 0)),           # attention weights
        ),
        compiler_params=pltpu.CompilerParams(
            dimension_semantics=("parallel",),        # megacore on v7x
            vmem_limit_bytes=48 * 1024 * 1024),       # v5e default is only 16 MiB
    )(annotations, hidden_state,
      fused_params["wa"], fused_params["wh"], fused_params["b"], fused_params["wo"])

    if S_pad != S:
        w = w[:, :S]
    return ctx, w


def init_params(key, input_size, hidden_size):
    """Deterministic init. Weights stored pre-transposed as [in, out]."""
    k = jax.random.split(key, 6)

    def u(kk, shape, fan_in):
        bound = 1.0 / jnp.sqrt(fan_in)
        return jax.random.uniform(kk, shape, jnp.float32, -bound, bound)

    return {
        "wa": u(k[0], (input_size, hidden_size), input_size),
        "ba": u(k[1], (1, hidden_size), input_size),
        "wh": u(k[2], (hidden_size, hidden_size), hidden_size),
        "bh": u(k[3], (1, hidden_size), hidden_size),
        "wo": u(k[4], (hidden_size, 1), hidden_size),
        "bo": u(k[5], (1, 1), hidden_size),
    }


def reference(annotations, hidden_state, params):
    hi = jax.lax.Precision.HIGHEST
    enc = jnp.matmul(annotations, params["wa"], precision=hi) + params["ba"]
    h = (jnp.matmul(hidden_state, params["wh"], precision=hi)
         + params["bh"])[:, None, :]
    t = jnp.tanh(enc + h)
    scores = (jnp.matmul(t, params["wo"], precision=hi) + params["bo"])[..., 0]
    w = jax.nn.softmax(scores, axis=-1)
    ctx = jnp.sum(w[..., None] * annotations, axis=1)
    return ctx, w


if __name__ == "__main__":
    B, S, INPUT_SIZE, HIDDEN_SIZE = 2, 8, 16, 32
    key = jax.random.PRNGKey(0)
    k_ann, k_hid, k_par = jax.random.split(key, 3)

    annotations = jax.random.normal(k_ann, (B, S, INPUT_SIZE), jnp.float32)
    hidden_state = jax.random.normal(k_hid, (B, HIDDEN_SIZE), jnp.float32)
    params = init_params(k_par, INPUT_SIZE, HIDDEN_SIZE)
    fused = prepare_params(params)   # hoisted out of the per-call path

    ctx_ref, w_ref = reference(annotations, hidden_state, params)

    # Exact (f32 MXU) path: tight tolerance, weights sum to 1.
    ctx32, w32 = attention_model(annotations, hidden_state, fused,
                                 matmul_dtype=jnp.float32)
    jax.block_until_ready((ctx32, w32))
    assert ctx32.shape == (B, INPUT_SIZE) and w32.shape == (B, S)
    assert jnp.allclose(ctx32, ctx_ref, atol=1e-4, rtol=1e-4)
    assert jnp.allclose(w32, w_ref, atol=1e-4, rtol=1e-4)
    assert jnp.allclose(jnp.sum(w32, axis=-1), 1.0, atol=1e-5)

    # Default (bf16 MXU operands, f32 accumulate) path: perf configuration.
    ctx, weights = attention_model(annotations, hidden_state, fused)
    jax.block_until_ready((ctx, weights))
    assert ctx.shape == (B, INPUT_SIZE) and weights.shape == (B, S)
    assert jnp.allclose(ctx, ctx_ref, atol=2e-2, rtol=2e-2)
    assert jnp.allclose(weights, w_ref, atol=2e-2, rtol=2e-2)
    # Exact divide => weights still normalize exactly even with bf16 matmuls.
    assert jnp.allclose(jnp.sum(weights, axis=-1), 1.0, atol=1e-5)

    print("KERNEL_OK")
</pallas_src>

<mosaic_0001>
module attributes {stable_mosaic.version = 11 : i64} {
  func.func @attention_kernel(%arg0: i32, %arg1: memref<2x8x16xf32, #tpu.memory_space<vmem>>, %arg2: memref<2x32xf32, #tpu.memory_space<vmem>>, %arg3: memref<16x32xf32, #tpu.memory_space<vmem>>, %arg4: memref<32x32xf32, #tpu.memory_space<vmem>>, %arg5: memref<1x32xf32, #tpu.memory_space<vmem>>, %arg6: memref<1x32xf32, #tpu.memory_space<vmem>>, %arg7: memref<2x16xf32, #tpu.memory_space<vmem>>, %arg8: memref<2x8xf32, #tpu.memory_space<vmem>>) attributes {dimension_semantics = [#tpu.dimension_semantics<parallel>], iteration_bounds = array<i64: 1>, scalar_prefetch = 0 : i64, scratch_operands = 0 : i64, tpu.core_type = #tpu.core_type<tc>, window_params = [{transform_indices = @transform_0, window_bounds = array<i64: 2, 8, 16>}, {transform_indices = @transform_1, window_bounds = array<i64: 2, 32>}, {pipeline_mode = #tpu.pipeline_mode<synchronous>, transform_indices = @transform_2, window_bounds = array<i64: 16, 32>}, {pipeline_mode = #tpu.pipeline_mode<synchronous>, transform_indices = @transform_3, window_bounds = array<i64: 32, 32>}, {pipeline_mode = #tpu.pipeline_mode<synchronous>, transform_indices = @transform_4, window_bounds = array<i64: 1, 32>}, {pipeline_mode = #tpu.pipeline_mode<synchronous>, transform_indices = @transform_5, window_bounds = array<i64: 1, 32>}, {transform_indices = @transform_6, window_bounds = array<i64: 2, 16>}, {transform_indices = @transform_7, window_bounds = array<i64: 2, 8>}]} {
    %c0 = arith.constant 0 : index
    %c0_0 = arith.constant 0 : index
    %c0_1 = arith.constant 0 : index
    %0 = vector.load %arg1[%c0, %c0_0, %c0_1] : memref<2x8x16xf32, #tpu.memory_space<vmem>>, vector<2x8x16xf32>
    %c0_2 = arith.constant 0 : index
    %c0_3 = arith.constant 0 : index
    %1 = vector.load %arg2[%c0_2, %c0_3] : memref<2x32xf32, #tpu.memory_space<vmem>>, vector<2x32xf32>
    %c0_4 = arith.constant 0 : index
    %c0_5 = arith.constant 0 : index
    %2 = vector.load %arg4[%c0_4, %c0_5] : memref<32x32xf32, #tpu.memory_space<vmem>>, vector<32x32xf32>
    %cst = arith.constant dense<0.000000e+00> : vector<2x32xf32>
    %3 = tpu.matmul %1, %2, %cst {dimension_numbers = #tpu.dot_dimension_numbers<[1], [0], [0], [1], [0, 0, 1, 1], [], []>, precision = #tpu.contract_precision<fp32>} : vector<2x32xf32>, vector<32x32xf32>, vector<2x32xf32> -> vector<2x32xf32>
    %c0_6 = arith.constant 0 : index
    %c0_7 = arith.constant 0 : index
    %4 = vector.load %arg5[%c0_6, %c0_7] : memref<1x32xf32, #tpu.memory_space<vmem>>, vector<1x32xf32>
    %5 = vector.broadcast %4 : vector<1x32xf32> to vector<2x32xf32>
    %6 = arith.addf %3, %5 : vector<2x32xf32>
    %7 = vector.shape_cast %0 : vector<2x8x16xf32> to vector<16x16xf32>
    %c0_8 = arith.constant 0 : index
    %c0_9 = arith.constant 0 : index
    %8 = vector.load %arg3[%c0_8, %c0_9] : memref<16x32xf32, #tpu.memory_space<vmem>>, vector<16x32xf32>
    %cst_10 = arith.constant dense<0.000000e+00> : vector<16x32xf32>
    %9 = tpu.matmul %7, %8, %cst_10 {dimension_numbers = #tpu.dot_dimension_numbers<[1], [0], [0], [1], [0, 0, 1, 1], [], []>, precision = #tpu.contract_precision<fp32>} : vector<16x16xf32>, vector<16x32xf32>, vector<16x32xf32> -> vector<16x32xf32>
    %10 = vector.shape_cast %9 : vector<16x32xf32> to vector<2x8x32xf32>
    %11 = vector.shape_cast %6 : vector<2x32xf32> to vector<2x1x32xf32>
    %12 = vector.broadcast %11 : vector<2x1x32xf32> to vector<2x8x32xf32>
    %13 = arith.addf %10, %12 : vector<2x8x32xf32>
    %14 = math.tanh %13 : vector<2x8x32xf32>
    %c0_11 = arith.constant 0 : index
    %c0_12 = arith.constant 0 : index
    %15 = vector.load %arg6[%c0_11, %c0_12] : memref<1x32xf32, #tpu.memory_space<vmem>>, vector<1x32xf32>
    %16 = vector.shape_cast %15 : vector<1x32xf32> to vector<1x1x32xf32>
    %17 = vector.broadcast %16 : vector<1x1x32xf32> to vector<2x8x32xf32>
    %18 = arith.mulf %14, %17 : vector<2x8x32xf32>
    %cst_13 = arith.constant dense<0.000000e+00> : vector<2x8xf32>
    %19 = vector.multi_reduction <add>, %18, %cst_13 [2] : vector<2x8x32xf32> to vector<2x8xf32>
    %20 = vector.shape_cast %19 : vector<2x8xf32> to vector<2x8x1xf32>
    %cst_14 = arith.constant dense<0xFF800000> : vector<2x1xf32>
    %21 = vector.multi_reduction <maximumf>, %20, %cst_14 [1] : vector<2x8x1xf32> to vector<2x1xf32>
    %22 = vector.shape_cast %21 : vector<2x1xf32> to vector<2x1x1xf32>
    %23 = vector.broadcast %22 : vector<2x1x1xf32> to vector<2x8x1xf32>
    %24 = arith.subf %20, %23 : vector<2x8x1xf32>
    %25 = math.exp %24 : vector<2x8x1xf32>
    %cst_15 = arith.constant dense<0.000000e+00> : vector<2x1xf32>
    %26 = vector.multi_reduction <add>, %25, %cst_15 [1] : vector<2x8x1xf32> to vector<2x1xf32>
    %27 = vector.shape_cast %26 : vector<2x1xf32> to vector<2x1x1xf32>
    %28 = vector.broadcast %27 : vector<2x1x1xf32> to vector<2x8x1xf32>
    %29 = arith.divf %25, %28 : vector<2x8x1xf32>
    %30 = vector.broadcast %29 : vector<2x8x1xf32> to vector<2x8x16xf32>
    %31 = arith.mulf %30, %0 : vector<2x8x16xf32>
    %cst_16 = arith.constant dense<0.000000e+00> : vector<2x16xf32>
    %32 = vector.multi_reduction <add>, %31, %cst_16 [1] : vector<2x8x16xf32> to vector<2x16xf32>
    %c0_17 = arith.constant 0 : index
    %c0_18 = arith.constant 0 : index
    %33 = vector.load %arg7[%c0_17, %c0_18] : memref<2x16xf32, #tpu.memory_space<vmem>>, vector<2x16xf32>
    tpu.vector_store %arg7[%c0_17, %c0_18], %32 {strides = array<i32>} : memref<2x16xf32, #tpu.memory_space<vmem>>, vector<2x16xf32>,
    %34 = vector.shape_cast %29 : vector<2x8x1xf32> to vector<2x8xf32>
    %c0_19 = arith.constant 0 : index
    %c0_20 = arith.constant 0 : index
    %35 = vector.load %arg8[%c0_19, %c0_20] : memref<2x8xf32, #tpu.memory_space<vmem>>, vector<2x8xf32>
    tpu.vector_store %arg8[%c0_19, %c0_20], %34 {strides = array<i32>} : memref<2x8xf32, #tpu.memory_space<vmem>>, vector<2x8xf32>,
    return
  }
  func.func @transform_0(%arg0: i32) -> (i32, i32, i32) {
    %c0_i32 = arith.constant 0 : i32
    %c0_i32_0 = arith.constant 0 : i32
    %c0_i32_1 = arith.constant 0 : i32
    return %arg0, %c0_i32, %c0_i32_0 : i32, i32, i32
  }
  func.func @transform_1(%arg0: i32) -> (i32, i32) {
    %c0_i32 = arith.constant 0 : i32
    %c0_i32_0 = arith.constant 0 : i32
    return %arg0, %c0_i32 : i32, i32
  }
  func.func @transform_2(%arg0: i32) -> (i32, i32) {
    %c0_i32 = arith.constant 0 : i32
    %c0_i32_0 = arith.constant 0 : i32
    %c0_i32_1 = arith.constant 0 : i32
    return %c0_i32, %c0_i32_0 : i32, i32
  }
  func.func @transform_3(%arg0: i32) -> (i32, i32) {
    %c0_i32 = arith.constant 0 : i32
    %c0_i32_0 = arith.constant 0 : i32
    %c0_i32_1 = arith.constant 0 : i32
    return %c0_i32, %c0_i32_0 : i32, i32
  }
  func.func @transform_4(%arg0: i32) -> (i32, i32) {
    %c0_i32 = arith.constant 0 : i32
    %c0_i32_0 = arith.constant 0 : i32
    %c0_i32_1 = arith.constant 0 : i32
    return %c0_i32, %c0_i32_0 : i32, i32
  }
  func.func @transform_5(%arg0: i32) -> (i32, i32) {
    %c0_i32 = arith.constant 0 : i32
    %c0_i32_0 = arith.constant 0 : i32
    %c0_i32_1 = arith.constant 0 : i32
    return %c0_i32, %c0_i32_0 : i32, i32
  }
  func.func @transform_6(%arg0: i32) -> (i32, i32) {
    %c0_i32 = arith.constant 0 : i32
    %c0_i32_0 = arith.constant 0 : i32
    return %arg0, %c0_i32 : i32, i32
  }
  func.func @transform_7(%arg0: i32) -> (i32, i32) {
    %c0_i32 = arith.constant 0 : i32
    %c0_i32_0 = arith.constant 0 : i32
    return %arg0, %c0_i32 : i32, i32
  }
}

</mosaic_0001>

<llo_original>
// kernel: tpu_custom_call.1
$region0: #{tpu_custom_call.1}
  #allocation0 [shape = 'u32[]', space=smem, size = 0x4, offset = 0x4, fixed_abs, tag = 'smem constant byte address 0x4 - core index']
  #allocation1 [shape = 'u32[144,128]{1,0:T(1,128)}', space=vmem, size = 0x12000, scoped, tag = 'internal scratch']
  %s0 = inlined_call_operand.hbm [shape: f32[2,8,16], index: 0, kind: input, shape index: {}]
  %s1 = inlined_call_operand.hbm [shape: f32[2,32], index: 1, kind: input, shape index: {}]
  %s2 = inlined_call_operand.hbm [shape: f32[16,32], index: 2, kind: input, shape index: {}]
  %s3 = inlined_call_operand.hbm [shape: f32[32,32], index: 3, kind: input, shape index: {}]
  %s4 = inlined_call_operand.vmem [shape: f32[1,32], index: 4, kind: input, shape index: {}]
  %s5 = inlined_call_operand.vmem [shape: f32[1,32], index: 5, kind: input, shape index: {}]
  %s6 = inlined_call_operand.hbm [shape: f32[2,16], index: 6, kind: output, shape index: {0}]
  %s7 = inlined_call_operand.hbm [shape: f32[2,8], index: 7, kind: output, shape index: {1}]
  %8 = xla_tuple %s6, %s7
  %s9 = sld [smem:[#allocation0]]
  $region58: #{tpu_custom_call.1} parent=0
    _
  %s11 = ssub.s32 1, %s9
  %s12 = scalar_select 0, %s11, %s9
  $region1: #{tpu_custom_call.1} parent=0
    #allocation2 [shape = 'u8[8192]{0}', space=vmem, size = 0x2000, scoped, tag = 'input window, operand 0, single buffered']
    #allocation3 [shape = 's32[1]{0}', space=sflag, size = 0x4, scoped, tag = 'scoped memory for tpu_custom_call.1']
    #allocation4 [shape = 's32[1]{0}', space=sflag, size = 0x4, scoped, tag = 'scoped memory for tpu_custom_call.1']
    #allocation5 [shape = 'u8[1024]{0}', space=vmem, size = 0x400, scoped, tag = 'input window, operand 1, single buffered']
    #allocation6 [shape = 's32[1]{0}', space=sflag, size = 0x4, scoped, tag = 'scoped memory for tpu_custom_call.1']
    #allocation7 [shape = 'u8[8192]{0}', space=vmem, size = 0x2000, scoped, tag = 'input window, operand 2, single buffered']
    #allocation8 [shape = 'u8[16384]{0}', space=vmem, size = 0x4000, scoped, tag = 'input window, operand 3, single buffered']
    #allocation9 [shape = 's32[1]{0}', space=sflag, size = 0x4, scoped, tag = 'scoped memory for tpu_custom_call.1']
    #allocation10 [shape = 'u8[1024]{0}', space=vmem, size = 0x400, scoped, tag = 'output window, operand 0, single buffered']
    #allocation11 [shape = 'u8[1024]{0}', space=vmem, size = 0x400, scoped, tag = 'output window, operand 1, single buffered']
    #allocation12 [shape = 's32[1]{0}', space=sflag, size = 0x4, scoped, tag = 'scoped memory for tpu_custom_call.1']
    %13 = vsyncpa [#allocation3], 0
    %14 = vsyncpa [#allocation6], 0
    %15 = vsyncpa [#allocation9], 0
    %16 = vsyncpa [#allocation4], 0
    %17 = vsyncpa [#allocation12], 0
    // Predicated region
    $region2: #{tpu_custom_call.1} parent=1 // pred_check
      _
    $region3: #{tpu_custom_call.1} parent=1 // pred_check_branch
      %19 = sbr.rel (0) target = $region5
    $region4: #{tpu_custom_call.1} parent=1 // pred_region
      %s21 = ssub.s32 256, 256
      %22 = vsyncadd [#allocation3], %s21
      %s23 = sshll.u32 [#allocation2], 4
      %s24 = int_to_ptr.vmem [resolvable:$true] %s23
      %29 = dma.hbm_to_vmem [thread:$0]  %s0, 256, %s24, [#allocation3], 128, 128, 8
    $region5: #{tpu_custom_call.1} parent=1 // pred_fallthru
      _
    // Predicated region
    $region6: #{tpu_custom_call.1} parent=1 // pred_check
      _
    $region7: #{tpu_custom_call.1} parent=1 // pred_check_branch
      %31 = sbr.rel (0) target = $region9
    $region8: #{tpu_custom_call.1} parent=1 // pred_region
      %s33 = ssub.s32 32, 32
      %34 = vsyncadd [#allocation6], %s33
      %s36 = sshll.u32 [#allocation5], 4
      %s37 = int_to_ptr.vmem [resolvable:$true] %s36
      %39 = dma.hbm_to_vmem [thread:$0]  %s1, 32, %s37, [#allocation6]
    $region9: #{tpu_custom_call.1} parent=1 // pred_fallthru
      _
    // Predicated region
    $region10: #{tpu_custom_call.1} parent=1 // pred_check
      _
    $region11: #{tpu_custom_call.1} parent=1 // pred_check_branch
      %41 = sbr.rel (0) target = $region13
    $region12: #{tpu_custom_call.1} parent=1 // pred_region
      %s43 = ssub.s32 256, 256
      %44 = vsyncadd [#allocation6], %s43
      %s45 = sshll.u32 [#allocation7], 4
      %s46 = int_to_ptr.vmem [resolvable:$true] %s45
      %51 = dma.hbm_to_vmem [thread:$0]  %s2, 256, %s46, [#allocation6], 128, 128, 8
    $region13: #{tpu_custom_call.1} parent=1 // pred_fallthru
      _
    // Predicated region
    $region14: #{tpu_custom_call.1} parent=1 // pred_check
      _
    $region15: #{tpu_custom_call.1} parent=1 // pred_check_branch
      %53 = sbr.rel (0) target = $region17
    $region16: #{tpu_custom_call.1} parent=1 // pred_region
      %s55 = ssub.s32 512, 512
      %56 = vsyncadd [#allocation9], %s55
      %s57 = sshll.u32 [#allocation8], 4
      %s58 = int_to_ptr.vmem [resolvable:$true] %s57
      %63 = dma.hbm_to_vmem [thread:$0]  %s3, 512, %s58, [#allocation9], 128, 128, 8
    $region17: #{tpu_custom_call.1} parent=1 // pred_fallthru
      _
    // Predicated region
    $region18: #{tpu_custom_call.1} parent=1 // pred_check
      _
    $region19: #{tpu_custom_call.1} parent=1 // pred_check_branch
      %65 = sbr.rel (0) target = $region21
    $region20: #{tpu_custom_call.1} parent=1 // pred_region
      _
    $region21: #{tpu_custom_call.1} parent=1 // pred_fallthru
      _
    // Predicated region
    $region22: #{tpu_custom_call.1} parent=1 // pred_check
      _
    $region23: #{tpu_custom_call.1} parent=1 // pred_check_branch
      %67 = sbr.rel (0) target = $region25
    $region24: #{tpu_custom_call.1} parent=1 // pred_region
      _
    $region25: #{tpu_custom_call.1} parent=1 // pred_fallthru
      _
    // Predicated region
    $region26: #{tpu_custom_call.1} parent=1 // pred_check
      _
    $region27: #{tpu_custom_call.1} parent=1 // pred_check_branch
      %69 = sbr.rel (0) target = $region29
    $region28: #{tpu_custom_call.1} parent=1 // pred_region
      %70 = dma.done [#allocation3], 256
    $region29: #{tpu_custom_call.1} parent=1 // pred_fallthru
      _
    // Predicated region
    $region30: #{tpu_custom_call.1} parent=1 // pred_check
      _
    $region31: #{tpu_custom_call.1} parent=1 // pred_check_branch
      %72 = sbr.rel (0) target = $region33
    $region32: #{tpu_custom_call.1} parent=1 // pred_region
      %73 = dma.done [#allocation6], 32
    $region33: #{tpu_custom_call.1} parent=1 // pred_fallthru
      _
    // Predicated region
    $region34: #{tpu_custom_call.1} parent=1 // pred_check
      _
    $region35: #{tpu_custom_call.1} parent=1 // pred_check_branch
      %75 = sbr.rel (0) target = $region37
    $region36: #{tpu_custom_call.1} parent=1 // pred_region
      %76 = dma.done [#allocation6], 256
    $region37: #{tpu_custom_call.1} parent=1 // pred_fallthru
      _
    // Predicated region
    $region38: #{tpu_custom_call.1} parent=1 // pred_check
      _
    $region39: #{tpu_custom_call.1} parent=1 // pred_check_branch
      %78 = sbr.rel (0) target = $region41
    $region40: #{tpu_custom_call.1} parent=1 // pred_region
      %79 = dma.done [#allocation9], 512
    $region41: #{tpu_custom_call.1} parent=1 // pred_fallthru
      _
    %v80 = vld [vmem:[#allocation2] sm:$0xff]
    %v81 = vld [vmem:[#allocation2 + $0x8] sm:$0xff]
    %v82 = vld [vmem:[#allocation5] sm:$0x3]
    %v83 = vld [vmem:[#allocation8] sm:$0xff]
    %v84 = vld [vmem:[#allocation8 + $0x8] sm:$0xff]
    %v85 = vld [vmem:[#allocation8 + $0x10] sm:$0xff]
    %v86 = vld [vmem:[#allocation8 + $0x18] sm:$0xff]
    %v87 = vld [vmem:[%s4] sm:$0x1]
    %v89 = vlaneseq
    %v90 = vshrl.u32 %v89, 7
    %v91 = vsub.s32 0, %v90
    %v92 = vrot.slane %v87, %v91
    %vm94 = vcmask 261120
    %v96 = vsel %vm94, %v82, 0
    %98 = vmatprep.subr.mxu0 0.0
    %99 = vmatpush1.msra.mxu0 0.0
    %100 = vmatprep.subr.mxu0 0.0
    %101 = vmatpush1.msra.mxu0 0.0
    %102 = vmatprep.subr.mxu0 0.0
    %103 = vmatpush1.msra.mxu0 0.0
    %104 = vmatprep.subr.mxu0 0.0
    %105 = vmatpush1.msra.mxu0 0.0
    %106 = vmatprep.subr.mxu0 0.0
    %107 = vmatpush1.msra.mxu0 0.0
    %108 = vmatprep.subr.mxu0 0.0
    %109 = vmatpush1.msra.mxu0 0.0
    %110 = vmatprep.subr.mxu0 0.0
    %111 = vmatpush1.msra.mxu0 0.0
    %112 = vmatprep.subr.mxu0 0.0
    %113 = vmatpush1.msra.mxu0 0.0
    %114 = vmatprep.subr.mxu0 0.0
    %115 = vmatpush1.msra.mxu0 0.0
    %116 = vmatprep.subr.mxu0 0.0
    %117 = vmatpush1.msra.mxu0 0.0
    %118 = vmatprep.subr.mxu0 0.0
    %119 = vmatpush1.msra.mxu0 0.0
    %120 = vmatprep.subr.mxu0 0.0
    %121 = vmatpush1.msra.mxu0 0.0
    %122 = vmatprep.subr.mxu0 0.0
    %v123 = vand.u32 %v86, 4294901760
    %124 = vmatpush1.msra.mxu0 %v123
    %125 = vmatprep.subr.mxu0 0.0
    %v126 = vand.u32 %v85, 4294901760
    %127 = vmatpush1.msra.mxu0 %v126
    %128 = vmatprep.subr.mxu0 0.0
    %v129 = vand.u32 %v84, 4294901760
    %130 = vmatpush1.msra.mxu0 %v129
    %131 = vmatprep.subr.mxu0 0.0
    %v132 = vand.u32 %v83, 4294901760
    %133 = vmatpush1.msra.mxu0 %v132
    %134 = vmatprep.subr.mxu0 0.0
    %135 = vmatpush2.msra.mxu0 0.0
    %136 = vmatprep.subr.mxu0 0.0
    %137 = vmatpush2.msra.mxu0 0.0
    %138 = vmatprep.subr.mxu0 0.0
    %139 = vmatpush2.msra.mxu0 0.0
    %140 = vmatprep.subr.mxu0 0.0
    %141 = vmatpush2.msra.mxu0 0.0
    %142 = vmatprep.subr.mxu0 0.0
    %143 = vmatpush2.msra.mxu0 0.0
    %144 = vmatprep.subr.mxu0 0.0
    %145 = vmatpush2.msra.mxu0 0.0
    %146 = vmatprep.subr.mxu0 0.0
    %147 = vmatpush2.msra.mxu0 0.0
    %148 = vmatprep.subr.mxu0 0.0
    %149 = vmatpush2.msra.mxu0 0.0
    %150 = vmatprep.subr.mxu0 0.0
    %151 = vmatpush2.msra.mxu0 0.0
    %152 = vmatprep.subr.mxu0 0.0
    %153 = vmatpush2.msra.mxu0 0.0
    %154 = vmatprep.subr.mxu0 0.0
    %155 = vmatpush2.msra.mxu0 0.0
    %156 = vmatprep.subr.mxu0 0.0
    %157 = vmatpush2.msra.mxu0 0.0
    %158 = vmatprep.subr.mxu0 0.0
    %159 = vmatpush2.msra.mxu0 0.0
    %160 = vmatprep.subr.mxu0 0.0
    %161 = vmatpush2.msra.mxu0 0.0
    %162 = vmatprep.subr.mxu0 0.0
    %163 = vmatpush2.msra.mxu0 0.0
    %164 = vmatprep.subr.mxu0 0.0
    %165 = vmatpush2.msra.mxu0 0.0
    %166 = vmatprep.mubr.f32.mxu0 0.0
    %v167 = vand.u32 %v96, 4294901760
    %v168 = vsub.f32 %v96, %v167
    %v169 = vand.u32 %v168, 4294901760
    %v170 = vsub.f32 %v168, %v169
    %v171 = vand.u32 %v170, 4294901760
    %172 = vmatmul.mubr.f32.gmra.mxu0 %v171
    %v173 = vpop.f32.mrf.mxu0
    %v174 = vadd.f32 %v92, %v173
    %v175 = vpop.f32.mrf.mxu0
    %176 = vdwg.mxu0
    %177 = vmatprep.subr.mxu0 0.0
    %178 = vmatpush1.msra.mxu0 0.0
    %179 = vmatprep.subr.mxu0 0.0
    %180 = vmatpush1.msra.mxu0 0.0
    %181 = vmatprep.subr.mxu0 0.0
    %182 = vmatpush1.msra.mxu0 0.0
    %183 = vmatprep.subr.mxu0 0.0
    %184 = vmatpush1.msra.mxu0 0.0
    %185 = vmatprep.subr.mxu0 0.0
    %186 = vmatpush1.msra.mxu0 0.0
    %187 = vmatprep.subr.mxu0 0.0
    %188 = vmatpush1.msra.mxu0 0.0
    %189 = vmatprep.subr.mxu0 0.0
    %190 = vmatpush1.msra.mxu0 0.0
    %191 = vmatprep.subr.mxu0 0.0
    %192 = vmatpush1.msra.mxu0 0.0
    %193 = vmatprep.subr.mxu0 0.0
    %194 = vmatpush1.msra.mxu0 0.0
    %195 = vmatprep.subr.mxu0 0.0
    %196 = vmatpush1.msra.mxu0 0.0
    %197 = vmatprep.subr.mxu0 0.0
    %198 = vmatpush1.msra.mxu0 0.0
    %199 = vmatprep.subr.mxu0 0.0
    %200 = vmatpush1.msra.mxu0 0.0
    %201 = vmatprep.subr.mxu0 0.0
    %v202 = vand.u32 %v86, 4294901760
    %v203 = vsub.f32 %v86, %v202
    %v204 = vand.u32 %v203, 4294901760
    %v205 = vsub.f32 %v203, %v204
    %v206 = vand.u32 %v205, 4294901760
    %207 = vmatpush1.msra.mxu0 %v206
    %208 = vmatprep.subr.mxu0 0.0
    %v209 = vand.u32 %v85, 4294901760
    %v210 = vsub.f32 %v85, %v209
    %v211 = vand.u32 %v210, 4294901760
    %v212 = vsub.f32 %v210, %v211
    %v213 = vand.u32 %v212, 4294901760
    %214 = vmatpush1.msra.mxu0 %v213
    %215 = vmatprep.subr.mxu0 0.0
    %v216 = vand.u32 %v84, 4294901760
    %v217 = vsub.f32 %v84, %v216
    %v218 = vand.u32 %v217, 4294901760
    %v219 = vsub.f32 %v217, %v218
    %v220 = vand.u32 %v219, 4294901760
    %221 = vmatpush1.msra.mxu0 %v220
    %222 = vmatprep.subr.mxu0 0.0
    %v223 = vand.u32 %v83, 4294901760
    %v224 = vsub.f32 %v83, %v223
    %v225 = vand.u32 %v224, 4294901760
    %v226 = vsub.f32 %v224, %v225
    %v227 = vand.u32 %v226, 4294901760
    %228 = vmatpush1.msra.mxu0 %v227
    %229 = vmatprep.subr.mxu0 0.0
    %230 = vmatpush2.msra.mxu0 0.0
    %231 = vmatprep.subr.mxu0 0.0
    %232 = vmatpush2.msra.mxu0 0.0
    %233 = vmatprep.subr.mxu0 0.0
    %234 = vmatpush2.msra.mxu0 0.0
    %235 = vmatprep.subr.mxu0 0.0
    %236 = vmatpush2.msra.mxu0 0.0
    %237 = vmatprep.subr.mxu0 0.0
    %238 = vmatpush2.msra.mxu0 0.0
    %239 = vmatprep.subr.mxu0 0.0
    %240 = vmatpush2.msra.mxu0 0.0
    %241 = vmatprep.subr.mxu0 0.0
    %242 = vmatpush2.msra.mxu0 0.0
    %243 = vmatprep.subr.mxu0 0.0
    %244 = vmatpush2.msra.mxu0 0.0
    %245 = vmatprep.subr.mxu0 0.0
    %246 = vmatpush2.msra.mxu0 0.0
    %247 = vmatprep.subr.mxu0 0.0
    %248 = vmatpush2.msra.mxu0 0.0
    %249 = vmatprep.subr.mxu0 0.0
    %250 = vmatpush2.msra.mxu0 0.0
    %251 = vmatprep.subr.mxu0 0.0
    %252 = vmatpush2.msra.mxu0 0.0
    %253 = vmatprep.subr.mxu0 0.0
    %254 = vmatpush2.msra.mxu0 0.0
    %255 = vmatprep.subr.mxu0 0.0
    %256 = vmatpush2.msra.mxu0 0.0
    %257 = vmatprep.subr.mxu0 0.0
    %258 = vmatpush2.msra.mxu0 0.0
    %259 = vmatprep.subr.mxu0 0.0
    %260 = vmatpush2.msra.mxu0 0.0
    %261 = vmatprep.mubr.f32.mxu0 0.0
    %v262 = vand.u32 %v96, 4294901760
    %263 = vmatmul.mubr.f32.gmra.mxu0 %v262
    %v264 = vpop.f32.mrf.mxu0
    %v265 = vadd.f32 %v174, %v264
    %v266 = vpop.f32.mrf.mxu0
    %267 = vdwg.mxu0
    %268 = vmatprep.subr.mxu0 0.0
    %269 = vmatpush1.msra.mxu0 0.0
    %270 = vmatprep.subr.mxu0 0.0
    %271 = vmatpush1.msra.mxu0 0.0
    %272 = vmatprep.subr.mxu0 0.0
    %273 = vmatpush1.msra.mxu0 0.0
    %274 = vmatprep.subr.mxu0 0.0
    %275 = vmatpush1.msra.mxu0 0.0
    %276 = vmatprep.subr.mxu0 0.0
    %277 = vmatpush1.msra.mxu0 0.0
    %278 = vmatprep.subr.mxu0 0.0
    %279 = vmatpush1.msra.mxu0 0.0
    %280 = vmatprep.subr.mxu0 0.0
    %281 = vmatpush1.msra.mxu0 0.0
    %282 = vmatprep.subr.mxu0 0.0
    %283 = vmatpush1.msra.mxu0 0.0
    %284 = vmatprep.subr.mxu0 0.0
    %285 = vmatpush1.msra.mxu0 0.0
    %286 = vmatprep.subr.mxu0 0.0
    %287 = vmatpush1.msra.mxu0 0.0
    %288 = vmatprep.subr.mxu0 0.0
    %289 = vmatpush1.msra.mxu0 0.0
    %290 = vmatprep.subr.mxu0 0.0
    %291 = vmatpush1.msra.mxu0 0.0
    %292 = vmatprep.subr.mxu0 0.0
    %v293 = vand.u32 %v86, 4294901760
    %v294 = vsub.f32 %v86, %v293
    %295 = vmatpush1.msra.mxu0 %v294
    %296 = vmatprep.subr.mxu0 0.0
    %v297 = vand.u32 %v85, 4294901760
    %v298 = vsub.f32 %v85, %v297
    %299 = vmatpush1.msra.mxu0 %v298
    %300 = vmatprep.subr.mxu0 0.0
    %v301 = vand.u32 %v84, 4294901760
    %v302 = vsub.f32 %v84, %v301
    %303 = vmatpush1.msra.mxu0 %v302
    %304 = vmatprep.subr.mxu0 0.0
    %v305 = vand.u32 %v83, 4294901760
    %v306 = vsub.f32 %v83, %v305
    %307 = vmatpush1.msra.mxu0 %v306
    %308 = vmatprep.subr.mxu0 0.0
    %309 = vmatpush2.msra.mxu0 0.0
    %310 = vmatprep.subr.mxu0 0.0
    %311 = vmatpush2.msra.mxu0 0.0
    %312 = vmatprep.subr.mxu0 0.0
    %313 = vmatpush2.msra.mxu0 0.0
    %314 = vmatprep.subr.mxu0 0.0
    %315 = vmatpush2.msra.mxu0 0.0
    %316 = vmatprep.subr.mxu0 0.0
    %317 = vmatpush2.msra.mxu0 0.0
    %318 = vmatprep.subr.mxu0 0.0
    %319 = vmatpush2.msra.mxu0 0.0
    %320 = vmatprep.subr.mxu0 0.0
    %321 = vmatpush2.msra.mxu0 0.0
    %322 = vmatprep.subr.mxu0 0.0
    %323 = vmatpush2.msra.mxu0 0.0
    %324 = vmatprep.subr.mxu0 0.0
    %325 = vmatpush2.msra.mxu0 0.0
    %326 = vmatprep.subr.mxu0 0.0
    %327 = vmatpush2.msra.mxu0 0.0
    %328 = vmatprep.subr.mxu0 0.0
    %329 = vmatpush2.msra.mxu0 0.0
    %330 = vmatprep.subr.mxu0 0.0
    %331 = vmatpush2.msra.mxu0 0.0
    %332 = vmatprep.subr.mxu0 0.0
    %333 = vmatpush2.msra.mxu0 0.0
    %334 = vmatprep.subr.mxu0 0.0
    %335 = vmatpush2.msra.mxu0 0.0
    %336 = vmatprep.subr.mxu0 0.0
    %337 = vmatpush2.msra.mxu0 0.0
    %338 = vmatprep.subr.mxu0 0.0
    %339 = vmatpush2.msra.mxu0 0.0
    %340 = vmatprep.mubr.f32.mxu0 0.0
    %v341 = vand.u32 %v96, 4294901760
    %v342 = vsub.f32 %v96, %v341
    %343 = vmatmul.mubr.f32.gmra.mxu0 %v342
    %v344 = vpop.f32.mrf.mxu0
    %v345 = vadd.f32 %v265, %v344
    %v346 = vpop.f32.mrf.mxu0
    %347 = vdwg.mxu0
    %348 = vmatprep.subr.mxu0 0.0
    %349 = vmatpush1.msra.mxu0 0.0
    %350 = vmatprep.subr.mxu0 0.0
    %351 = vmatpush1.msra.mxu0 0.0
    %352 = vmatprep.subr.mxu0 0.0
    %353 = vmatpush1.msra.mxu0 0.0
    %354 = vmatprep.subr.mxu0 0.0
    %355 = vmatpush1.msra.mxu0 0.0
    %356 = vmatprep.subr.mxu0 0.0
    %357 = vmatpush1.msra.mxu0 0.0
    %358 = vmatprep.subr.mxu0 0.0
    %359 = vmatpush1.msra.mxu0 0.0
    %360 = vmatprep.subr.mxu0 0.0
    %361 = vmatpush1.msra.mxu0 0.0
    %362 = vmatprep.subr.mxu0 0.0
    %363 = vmatpush1.msra.mxu0 0.0
    %364 = vmatprep.subr.mxu0 0.0
    %365 = vmatpush1.msra.mxu0 0.0
    %366 = vmatprep.subr.mxu0 0.0
    %367 = vmatpush1.msra.mxu0 0.0
    %368 = vmatprep.subr.mxu0 0.0
    %369 = vmatpush1.msra.mxu0 0.0
    %370 = vmatprep.subr.mxu0 0.0
    %371 = vmatpush1.msra.mxu0 0.0
    %372 = vmatprep.subr.mxu0 0.0
    %v373 = vand.u32 %v86, 4294901760
    %374 = vmatpush1.msra.mxu0 %v373
    %375 = vmatprep.subr.mxu0 0.0
    %v376 = vand.u32 %v85, 4294901760
    %377 = vmatpush1.msra.mxu0 %v376
    %378 = vmatprep.subr.mxu0 0.0
    %v379 = vand.u32 %v84, 4294901760
    %380 = vmatpush1.msra.mxu0 %v379
    %381 = vmatprep.subr.mxu0 0.0
    %v382 = vand.u32 %v83, 4294901760
    %383 = vmatpush1.msra.mxu0 %v382
    %384 = vmatprep.subr.mxu0 0.0
    %385 = vmatpush2.msra.mxu0 0.0
    %386 = vmatprep.subr.mxu0 0.0
    %387 = vmatpush2.msra.mxu0 0.0
    %388 = vmatprep.subr.mxu0 0.0
    %389 = vmatpush2.msra.mxu0 0.0
    %390 = vmatprep.subr.mxu0 0.0
    %391 = vmatpush2.msra.mxu0 0.0
    %392 = vmatprep.subr.mxu0 0.0
    %393 = vmatpush2.msra.mxu0 0.0
    %394 = vmatprep.subr.mxu0 0.0
    %395 = vmatpush2.msra.mxu0 0.0
    %396 = vmatprep.subr.mxu0 0.0
    %397 = vmatpush2.msra.mxu0 0.0
    %398 = vmatprep.subr.mxu0 0.0
    %399 = vmatpush2.msra.mxu0 0.0
    %400 = vmatprep.subr.mxu0 0.0
    %401 = vmatpush2.msra.mxu0 0.0
    %402 = vmatprep.subr.mxu0 0.0
    %403 = vmatpush2.msra.mxu0 0.0
    %404 = vmatprep.subr.mxu0 0.0
    %405 = vmatpush2.msra.mxu0 0.0
    %406 = vmatprep.subr.mxu0 0.0
    %407 = vmatpush2.msra.mxu0 0.0
    %408 = vmatprep.subr.mxu0 0.0
    %409 = vmatpush2.msra.mxu0 0.0
    %410 = vmatprep.subr.mxu0 0.0
    %411 = vmatpush2.msra.mxu0 0.0
    %412 = vmatprep.subr.mxu0 0.0
    %413 = vmatpush2.msra.mxu0 0.0
    %414 = vmatprep.subr.mxu0 0.0
    %415 = vmatpush2.msra.mxu0 0.0
    %416 = vmatprep.mubr.f32.mxu0 0.0
    %v417 = vand.u32 %v96, 4294901760
    %v418 = vsub.f32 %v96, %v417
    %v419 = vand.u32 %v418, 4294901760
    %420 = vmatmul.mubr.f32.gmra.mxu0 %v419
    %v421 = vpop.f32.mrf.mxu0
    %v422 = vadd.f32 %v345, %v421
    %v423 = vpop.f32.mrf.mxu0
    %424 = vdwg.mxu0
    %425 = vmatprep.subr.mxu0 0.0
    %426 = vmatpush1.msra.mxu0 0.0
    %427 = vmatprep.subr.mxu0 0.0
    %428 = vmatpush1.msra.mxu0 0.0
    %429 = vmatprep.subr.mxu0 0.0
    %430 = vmatpush1.msra.mxu0 0.0
    %431 = vmatprep.subr.mxu0 0.0
    %432 = vmatpush1.msra.mxu0 0.0
    %433 = vmatprep.subr.mxu0 0.0
    %434 = vmatpush1.msra.mxu0 0.0
    %435 = vmatprep.subr.mxu0 0.0
    %436 = vmatpush1.msra.mxu0 0.0
    %437 = vmatprep.subr.mxu0 0.0
    %438 = vmatpush1.msra.mxu0 0.0
    %439 = vmatprep.subr.mxu0 0.0
    %440 = vmatpush1.msra.mxu0 0.0
    %441 = vmatprep.subr.mxu0 0.0
    %442 = vmatpush1.msra.mxu0 0.0
    %443 = vmatprep.subr.mxu0 0.0
    %444 = vmatpush1.msra.mxu0 0.0
    %445 = vmatprep.subr.mxu0 0.0
    %446 = vmatpush1.msra.mxu0 0.0
    %447 = vmatprep.subr.mxu0 0.0
    %448 = vmatpush1.msra.mxu0 0.0
    %449 = vmatprep.subr.mxu0 0.0
    %v450 = vand.u32 %v86, 4294901760
    %v451 = vsub.f32 %v86, %v450
    %v452 = vand.u32 %v451, 4294901760
    %453 = vmatpush1.msra.mxu0 %v452
    %454 = vmatprep.subr.mxu0 0.0
    %v455 = vand.u32 %v85, 4294901760
    %v456 = vsub.f32 %v85, %v455
    %v457 = vand.u32 %v456, 4294901760
    %458 = vmatpush1.msra.mxu0 %v457
    %459 = vmatprep.subr.mxu0 0.0
    %v460 = vand.u32 %v84, 4294901760
    %v461 = vsub.f32 %v84, %v460
    %v462 = vand.u32 %v461, 4294901760
    %463 = vmatpush1.msra.mxu0 %v462
    %464 = vmatprep.subr.mxu0 0.0
    %v465 = vand.u32 %v83, 4294901760
    %v466 = vsub.f32 %v83, %v465
    %v467 = vand.u32 %v466, 4294901760
    %468 = vmatpush1.msra.mxu0 %v467
    %469 = vmatprep.subr.mxu0 0.0
    %470 = vmatpush2.msra.mxu0 0.0
    %471 = vmatprep.subr.mxu0 0.0
    %472 = vmatpush2.msra.mxu0 0.0
    %473 = vmatprep.subr.mxu0 0.0
    %474 = vmatpush2.msra.mxu0 0.0
    %475 = vmatprep.subr.mxu0 0.0
    %476 = vmatpush2.msra.mxu0 0.0
    %477 = vmatprep.subr.mxu0 0.0
    %478 = vmatpush2.msra.mxu0 0.0
    %479 = vmatprep.subr.mxu0 0.0
    %480 = vmatpush2.msra.mxu0 0.0
    %481 = vmatprep.subr.mxu0 0.0
    %482 = vmatpush2.msra.mxu0 0.0
    %483 = vmatprep.subr.mxu0 0.0
    %484 = vmatpush2.msra.mxu0 0.0
    %485 = vmatprep.subr.mxu0 0.0
    %486 = vmatpush2.msra.mxu0 0.0
    %487 = vmatprep.subr.mxu0 0.0
    %488 = vmatpush2.msra.mxu0 0.0
    %489 = vmatprep.subr.mxu0 0.0
    %490 = vmatpush2.msra.mxu0 0.0
    %491 = vmatprep.subr.mxu0 0.0
    %492 = vmatpush2.msra.mxu0 0.0
    %493 = vmatprep.subr.mxu0 0.0
    %494 = vmatpush2.msra.mxu0 0.0
    %495 = vmatprep.subr.mxu0 0.0
    %496 = vmatpush2.msra.mxu0 0.0
    %497 = vmatprep.subr.mxu0 0.0
    %498 = vmatpush2.msra.mxu0 0.0
    %499 = vmatprep.subr.mxu0 0.0
    %500 = vmatpush2.msra.mxu0 0.0
    %501 = vmatprep.mubr.f32.mxu0 0.0
    %v502 = vand.u32 %v96, 4294901760
    %503 = vmatmul.mubr.f32.gmra.mxu0 %v502
    %v504 = vpop.f32.mrf.mxu0
    %v505 = vadd.f32 %v422, %v504
    %v506 = vpop.f32.mrf.mxu0
    %507 = vdwg.mxu0
    %508 = vmatprep.subr.mxu0 0.0
    %509 = vmatpush1.msra.mxu0 0.0
    %510 = vmatprep.subr.mxu0 0.0
    %511 = vmatpush1.msra.mxu0 0.0
    %512 = vmatprep.subr.mxu0 0.0
    %513 = vmatpush1.msra.mxu0 0.0
    %514 = vmatprep.subr.mxu0 0.0
    %515 = vmatpush1.msra.mxu0 0.0
    %516 = vmatprep.subr.mxu0 0.0
    %517 = vmatpush1.msra.mxu0 0.0
    %518 = vmatprep.subr.mxu0 0.0
    %519 = vmatpush1.msra.mxu0 0.0
    %520 = vmatprep.subr.mxu0 0.0
    %521 = vmatpush1.msra.mxu0 0.0
    %522 = vmatprep.subr.mxu0 0.0
    %523 = vmatpush1.msra.mxu0 0.0
    %524 = vmatprep.subr.mxu0 0.0
    %525 = vmatpush1.msra.mxu0 0.0
    %526 = vmatprep.subr.mxu0 0.0
    %527 = vmatpush1.msra.mxu0 0.0
    %528 = vmatprep.subr.mxu0 0.0
    %529 = vmatpush1.msra.mxu0 0.0
    %530 = vmatprep.subr.mxu0 0.0
    %531 = vmatpush1.msra.mxu0 0.0
    %532 = vmatprep.subr.mxu0 0.0
    %v533 = vand.u32 %v86, 4294901760
    %534 = vmatpush1.msra.mxu0 %v533
    %535 = vmatprep.subr.mxu0 0.0
    %v536 = vand.u32 %v85, 4294901760
    %537 = vmatpush1.msra.mxu0 %v536
    %538 = vmatprep.subr.mxu0 0.0
    %v539 = vand.u32 %v84, 4294901760
    %540 = vmatpush1.msra.mxu0 %v539
    %541 = vmatprep.subr.mxu0 0.0
    %v542 = vand.u32 %v83, 4294901760
    %543 = vmatpush1.msra.mxu0 %v542
    %544 = vmatprep.subr.mxu0 0.0
    %545 = vmatpush2.msra.mxu0 0.0
    %546 = vmatprep.subr.mxu0 0.0
    %547 = vmatpush2.msra.mxu0 0.0
    %548 = vmatprep.subr.mxu0 0.0
    %549 = vmatpush2.msra.mxu0 0.0
    %550 = vmatprep.subr.mxu0 0.0
    %551 = vmatpush2.msra.mxu0 0.0
    %552 = vmatprep.subr.mxu0 0.0
    %553 = vmatpush2.msra.mxu0 0.0
    %554 = vmatprep.subr.mxu0 0.0
    %555 = vmatpush2.msra.mxu0 0.0
    %556 = vmatprep.subr.mxu0 0.0
    %557 = vmatpush2.msra.mxu0 0.0
    %558 = vmatprep.subr.mxu0 0.0
    %559 = vmatpush2.msra.mxu0 0.0
    %560 = vmatprep.subr.mxu0 0.0
    %561 = vmatpush2.msra.mxu0 0.0
    %562 = vmatprep.subr.mxu0 0.0
    %563 = vmatpush2.msra.mxu0 0.0
    %564 = vmatprep.subr.mxu0 0.0
    %565 = vmatpush2.msra.mxu0 0.0
    %566 = vmatprep.subr.mxu0 0.0
    %567 = vmatpush2.msra.mxu0 0.0
    %568 = vmatprep.subr.mxu0 0.0
    %569 = vmatpush2.msra.mxu0 0.0
    %570 = vmatprep.subr.mxu0 0.0
    %571 = vmatpush2.msra.mxu0 0.0
    %572 = vmatprep.subr.mxu0 0.0
    %573 = vmatpush2.msra.mxu0 0.0
    %574 = vmatprep.subr.mxu0 0.0
    %575 = vmatpush2.msra.mxu0 0.0
    %576 = vmatprep.mubr.f32.mxu0 0.0
    %v577 = vand.u32 %v96, 4294901760
    %578 = vmatmul.mubr.f32.gmra.mxu0 %v577
    %v579 = vpop.f32.mrf.mxu0
    %v580 = vadd.f32 %v505, %v579
    %v581 = vpop.f32.mrf.mxu0
    %582 = vdwg.mxu0
    %v583 = vld [vmem:[#allocation7] sm:$0xff]
    %v584 = vld [vmem:[#allocation7 + $0x8] sm:$0xff]
    %vm585 = vcmask 130048
    %v587 = vsel %vm585, %v80, 0
    %v590 = vsel %vm585, %v81, 0
    %592 = vmatprep.subr.mxu0 0.0
    %593 = vmatpush1.msra.mxu0 0.0
    %594 = vmatprep.subr.mxu0 0.0
    %595 = vmatpush1.msra.mxu0 0.0
    %596 = vmatprep.subr.mxu0 0.0
    %597 = vmatpush1.msra.mxu0 0.0
    %598 = vmatprep.subr.mxu0 0.0
    %599 = vmatpush1.msra.mxu0 0.0
    %600 = vmatprep.subr.mxu0 0.0
    %601 = vmatpush1.msra.mxu0 0.0
    %602 = vmatprep.subr.mxu0 0.0
    %603 = vmatpush1.msra.mxu0 0.0
    %604 = vmatprep.subr.mxu0 0.0
    %605 = vmatpush1.msra.mxu0 0.0
    %606 = vmatprep.subr.mxu0 0.0
    %607 = vmatpush1.msra.mxu0 0.0
    %608 = vmatprep.subr.mxu0 0.0
    %609 = vmatpush1.msra.mxu0 0.0
    %610 = vmatprep.subr.mxu0 0.0
    %611 = vmatpush1.msra.mxu0 0.0
    %612 = vmatprep.subr.mxu0 0.0
    %613 = vmatpush1.msra.mxu0 0.0
    %614 = vmatprep.subr.mxu0 0.0
    %615 = vmatpush1.msra.mxu0 0.0
    %616 = vmatprep.subr.mxu0 0.0
    %617 = vmatpush1.msra.mxu0 0.0
    %618 = vmatprep.subr.mxu0 0.0
    %619 = vmatpush1.msra.mxu0 0.0
    %620 = vmatprep.subr.mxu0 0.0
    %v621 = vand.u32 %v584, 4294901760
    %622 = vmatpush1.msra.mxu0 %v621
    %623 = vmatprep.subr.mxu0 0.0
    %v624 = vand.u32 %v583, 4294901760
    %625 = vmatpush1.msra.mxu0 %v624
    %626 = vmatprep.subr.mxu0 0.0
    %627 = vmatpush2.msra.mxu0 0.0
    %628 = vmatprep.subr.mxu0 0.0
    %629 = vmatpush2.msra.mxu0 0.0
    %630 = vmatprep.subr.mxu0 0.0
    %631 = vmatpush2.msra.mxu0 0.0
    %632 = vmatprep.subr.mxu0 0.0
    %633 = vmatpush2.msra.mxu0 0.0
    %634 = vmatprep.subr.mxu0 0.0
    %635 = vmatpush2.msra.mxu0 0.0
    %636 = vmatprep.subr.mxu0 0.0
    %637 = vmatpush2.msra.mxu0 0.0
    %638 = vmatprep.subr.mxu0 0.0
    %639 = vmatpush2.msra.mxu0 0.0
    %640 = vmatprep.subr.mxu0 0.0
    %641 = vmatpush2.msra.mxu0 0.0
    %642 = vmatprep.subr.mxu0 0.0
    %643 = vmatpush2.msra.mxu0 0.0
    %644 = vmatprep.subr.mxu0 0.0
    %645 = vmatpush2.msra.mxu0 0.0
    %646 = vmatprep.subr.mxu0 0.0
    %647 = vmatpush2.msra.mxu0 0.0
    %648 = vmatprep.subr.mxu0 0.0
    %649 = vmatpush2.msra.mxu0 0.0
    %650 = vmatprep.subr.mxu0 0.0
    %651 = vmatpush2.msra.mxu0 0.0
    %652 = vmatprep.subr.mxu0 0.0
    %653 = vmatpush2.msra.mxu0 0.0
    %654 = vmatprep.subr.mxu0 0.0
    %655 = vmatpush2.msra.mxu0 0.0
    %656 = vmatprep.subr.mxu0 0.0
    %657 = vmatpush2.msra.mxu0 0.0
    %658 = vmatprep.mubr.f32.mxu0 0.0
    %v659 = vand.u32 %v587, 4294901760
    %v660 = vsub.f32 %v587, %v659
    %v661 = vand.u32 %v660, 4294901760
    %v662 = vsub.f32 %v660, %v661
    %v663 = vand.u32 %v662, 4294901760
    %664 = vmatmul.mubr.f32.gmra.mxu0 %v663
    %v665 = vpop.f32.mrf.mxu0
    %v666 = vadd.f32 0.0, %v665
    %v667 = vpop.f32.mrf.mxu0
    %668 = vmatprep.mubr.f32.mxu0 0.0
    %v669 = vand.u32 %v590, 4294901760
    %v670 = vsub.f32 %v590, %v669
    %v671 = vand.u32 %v670, 4294901760
    %v672 = vsub.f32 %v670, %v671
    %v673 = vand.u32 %v672, 4294901760
    %674 = vmatmul.mubr.f32.gmra.mxu0 %v673
    %v675 = vpop.f32.mrf.mxu0
    %v676 = vadd.f32 0.0, %v675
    %v677 = vpop.f32.mrf.mxu0
    %678 = vdwg.mxu0
    %679 = vmatprep.subr.mxu0 0.0
    %680 = vmatpush1.msra.mxu0 0.0
    %681 = vmatprep.subr.mxu0 0.0
    %682 = vmatpush1.msra.mxu0 0.0
    %683 = vmatprep.subr.mxu0 0.0
    %684 = vmatpush1.msra.mxu0 0.0
    %685 = vmatprep.subr.mxu0 0.0
    %686 = vmatpush1.msra.mxu0 0.0
    %687 = vmatprep.subr.mxu0 0.0
    %688 = vmatpush1.msra.mxu0 0.0
    %689 = vmatprep.subr.mxu0 0.0
    %690 = vmatpush1.msra.mxu0 0.0
    %691 = vmatprep.subr.mxu0 0.0
    %692 = vmatpush1.msra.mxu0 0.0
    %693 = vmatprep.subr.mxu0 0.0
    %694 = vmatpush1.msra.mxu0 0.0
    %695 = vmatprep.subr.mxu0 0.0
    %696 = vmatpush1.msra.mxu0 0.0
    %697 = vmatprep.subr.mxu0 0.0
    %698 = vmatpush1.msra.mxu0 0.0
    %699 = vmatprep.subr.mxu0 0.0
    %700 = vmatpush1.msra.mxu0 0.0
    %701 = vmatprep.subr.mxu0 0.0
    %702 = vmatpush1.msra.mxu0 0.0
    %703 = vmatprep.subr.mxu0 0.0
    %704 = vmatpush1.msra.mxu0 0.0
    %705 = vmatprep.subr.mxu0 0.0
    %706 = vmatpush1.msra.mxu0 0.0
    %707 = vmatprep.subr.mxu0 0.0
    %v708 = vand.u32 %v584, 4294901760
    %v709 = vsub.f32 %v584, %v708
    %v710 = vand.u32 %v709, 4294901760
    %v711 = vsub.f32 %v709, %v710
    %v712 = vand.u32 %v711, 4294901760
    %713 = vmatpush1.msra.mxu0 %v712
    %714 = vmatprep.subr.mxu0 0.0
    %v715 = vand.u32 %v583, 4294901760
    %v716 = vsub.f32 %v583, %v715
    %v717 = vand.u32 %v716, 4294901760
    %v718 = vsub.f32 %v716, %v717
    %v719 = vand.u32 %v718, 4294901760
    %720 = vmatpush1.msra.mxu0 %v719
    %721 = vmatprep.subr.mxu0 0.0
    %722 = vmatpush2.msra.mxu0 0.0
    %723 = vmatprep.subr.mxu0 0.0
    %724 = vmatpush2.msra.mxu0 0.0
    %725 = vmatprep.subr.mxu0 0.0
    %726 = vmatpush2.msra.mxu0 0.0
    %727 = vmatprep.subr.mxu0 0.0
    %728 = vmatpush2.msra.mxu0 0.0
    %729 = vmatprep.subr.mxu0 0.0
    %730 = vmatpush2.msra.mxu0 0.0
    %731 = vmatprep.subr.mxu0 0.0
    %732 = vmatpush2.msra.mxu0 0.0
    %733 = vmatprep.subr.mxu0 0.0
    %734 = vmatpush2.msra.mxu0 0.0
    %735 = vmatprep.subr.mxu0 0.0
    %736 = vmatpush2.msra.mxu0 0.0
    %737 = vmatprep.subr.mxu0 0.0
    %738 = vmatpush2.msra.mxu0 0.0
    %739 = vmatprep.subr.mxu0 0.0
    %740 = vmatpush2.msra.mxu0 0.0
    %741 = vmatprep.subr.mxu0 0.0
    %742 = vmatpush2.msra.mxu0 0.0
    %743 = vmatprep.subr.mxu0 0.0
    %744 = vmatpush2.msra.mxu0 0.0
    %745 = vmatprep.subr.mxu0 0.0
    %746 = vmatpush2.msra.mxu0 0.0
    %747 = vmatprep.subr.mxu0 0.0
    %748 = vmatpush2.msra.mxu0 0.0
    %749 = vmatprep.subr.mxu0 0.0
    %750 = vmatpush2.msra.mxu0 0.0
    %751 = vmatprep.subr.mxu0 0.0
    %752 = vmatpush2.msra.mxu0 0.0
    %753 = vmatprep.mubr.f32.mxu0 0.0
    %v754 = vand.u32 %v587, 4294901760
    %755 = vmatmul.mubr.f32.gmra.mxu0 %v754
    %v756 = vpop.f32.mrf.mxu0
    %v757 = vadd.f32 %v666, %v756
    %v758 = vpop.f32.mrf.mxu0
    %759 = vmatprep.mubr.f32.mxu0 0.0
    %v760 = vand.u32 %v590, 4294901760
    %761 = vmatmul.mubr.f32.gmra.mxu0 %v760
    %v762 = vpop.f32.mrf.mxu0
    %v763 = vadd.f32 %v676, %v762
    %v764 = vpop.f32.mrf.mxu0
    %765 = vdwg.mxu0
    %766 = vmatprep.subr.mxu0 0.0
    %767 = vmatpush1.msra.mxu0 0.0
    %768 = vmatprep.subr.mxu0 0.0
    %769 = vmatpush1.msra.mxu0 0.0
    %770 = vmatprep.subr.mxu0 0.0
    %771 = vmatpush1.msra.mxu0 0.0
    %772 = vmatprep.subr.mxu0 0.0
    %773 = vmatpush1.msra.mxu0 0.0
    %774 = vmatprep.subr.mxu0 0.0
    %775 = vmatpush1.msra.mxu0 0.0
    %776 = vmatprep.subr.mxu0 0.0
    %777 = vmatpush1.msra.mxu0 0.0
    %778 = vmatprep.subr.mxu0 0.0
    %779 = vmatpush1.msra.mxu0 0.0
    %780 = vmatprep.subr.mxu0 0.0
    %781 = vmatpush1.msra.mxu0 0.0
    %782 = vmatprep.subr.mxu0 0.0
    %783 = vmatpush1.msra.mxu0 0.0
    %784 = vmatprep.subr.mxu0 0.0
    %785 = vmatpush1.msra.mxu0 0.0
    %786 = vmatprep.subr.mxu0 0.0
    %787 = vmatpush1.msra.mxu0 0.0
    %788 = vmatprep.subr.mxu0 0.0
    %789 = vmatpush1.msra.mxu0 0.0
    %790 = vmatprep.subr.mxu0 0.0
    %791 = vmatpush1.msra.mxu0 0.0
    %792 = vmatprep.subr.mxu0 0.0
    %793 = vmatpush1.msra.mxu0 0.0
    %794 = vmatprep.subr.mxu0 0.0
    %v795 = vand.u32 %v584, 4294901760
    %v796 = vsub.f32 %v584, %v795
    %797 = vmatpush1.msra.mxu0 %v796
    %798 = vmatprep.subr.mxu0 0.0
    %v799 = vand.u32 %v583, 4294901760
    %v800 = vsub.f32 %v583, %v799
    %801 = vmatpush1.msra.mxu0 %v800
    %802 = vmatprep.subr.mxu0 0.0
    %803 = vmatpush2.msra.mxu0 0.0
    %804 = vmatprep.subr.mxu0 0.0
    %805 = vmatpush2.msra.mxu0 0.0
    %806 = vmatprep.subr.mxu0 0.0
    %807 = vmatpush2.msra.mxu0 0.0
    %808 = vmatprep.subr.mxu0 0.0
    %809 = vmatpush2.msra.mxu0 0.0
    %810 = vmatprep.subr.mxu0 0.0
    %811 = vmatpush2.msra.mxu0 0.0
    %812 = vmatprep.subr.mxu0 0.0
    %813 = vmatpush2.msra.mxu0 0.0
    %814 = vmatprep.subr.mxu0 0.0
    %815 = vmatpush2.msra.mxu0 0.0
    %816 = vmatprep.subr.mxu0 0.0
    %817 = vmatpush2.msra.mxu0 0.0
    %818 = vmatprep.subr.mxu0 0.0
    %819 = vmatpush2.msra.mxu0 0.0
    %820 = vmatprep.subr.mxu0 0.0
    %821 = vmatpush2.msra.mxu0 0.0
    %822 = vmatprep.subr.mxu0 0.0
    %823 = vmatpush2.msra.mxu0 0.0
    %824 = vmatprep.subr.mxu0 0.0
    %825 = vmatpush2.msra.mxu0 0.0
    %826 = vmatprep.subr.mxu0 0.0
    %827 = vmatpush2.msra.mxu0 0.0
    %828 = vmatprep.subr.mxu0 0.0
    %829 = vmatpush2.msra.mxu0 0.0
    %830 = vmatprep.subr.mxu0 0.0
    %831 = vmatpush2.msra.mxu0 0.0
    %832 = vmatprep.subr.mxu0 0.0
    %833 = vmatpush2.msra.mxu0 0.0
    %834 = vmatprep.mubr.f32.mxu0 0.0
    %v835 = vand.u32 %v587, 4294901760
    %v836 = vsub.f32 %v587, %v835
    %837 = vmatmul.mubr.f32.gmra.mxu0 %v836
    %v838 = vpop.f32.mrf.mxu0
    %v839 = vadd.f32 %v757, %v838
    %v840 = vpop.f32.mrf.mxu0
    %841 = vmatprep.mubr.f32.mxu0 0.0
    %v842 = vand.u32 %v590, 4294901760
    %v843 = vsub.f32 %v590, %v842
    %844 = vmatmul.mubr.f32.gmra.mxu0 %v843
    %v845 = vpop.f32.mrf.mxu0
    %v846 = vadd.f32 %v763, %v845
    %v847 = vpop.f32.mrf.mxu0
    %848 = vdwg.mxu0
    %849 = vmatprep.subr.mxu0 0.0
    %850 = vmatpush1.msra.mxu0 0.0
    %851 = vmatprep.subr.mxu0 0.0
    %852 = vmatpush1.msra.mxu0 0.0
    %853 = vmatprep.subr.mxu0 0.0
    %854 = vmatpush1.msra.mxu0 0.0
    %855 = vmatprep.subr.mxu0 0.0
    %856 = vmatpush1.msra.mxu0 0.0
    %857 = vmatprep.subr.mxu0 0.0
    %858 = vmatpush1.msra.mxu0 0.0
    %859 = vmatprep.subr.mxu0 0.0
    %860 = vmatpush1.msra.mxu0 0.0
    %861 = vmatprep.subr.mxu0 0.0
    %862 = vmatpush1.msra.mxu0 0.0
    %863 = vmatprep.subr.mxu0 0.0
    %864 = vmatpush1.msra.mxu0 0.0
    %865 = vmatprep.subr.mxu0 0.0
    %866 = vmatpush1.msra.mxu0 0.0
    %867 = vmatprep.subr.mxu0 0.0
    %868 = vmatpush1.msra.mxu0 0.0
    %869 = vmatprep.subr.mxu0 0.0
    %870 = vmatpush1.msra.mxu0 0.0
    %871 = vmatprep.subr.mxu0 0.0
    %872 = vmatpush1.msra.mxu0 0.0
    %873 = vmatprep.subr.mxu0 0.0
    %874 = vmatpush1.msra.mxu0 0.0
    %875 = vmatprep.subr.mxu0 0.0
    %876 = vmatpush1.msra.mxu0 0.0
    %877 = vmatprep.subr.mxu0 0.0
    %v878 = vand.u32 %v584, 4294901760
    %879 = vmatpush1.msra.mxu0 %v878
    %880 = vmatprep.subr.mxu0 0.0
    %v881 = vand.u32 %v583, 4294901760
    %882 = vmatpush1.msra.mxu0 %v881
    %883 = vmatprep.subr.mxu0 0.0
    %884 = vmatpush2.msra.mxu0 0.0
    %885 = vmatprep.subr.mxu0 0.0
    %886 = vmatpush2.msra.mxu0 0.0
    %887 = vmatprep.subr.mxu0 0.0
    %888 = vmatpush2.msra.mxu0 0.0
    %889 = vmatprep.subr.mxu0 0.0
    %890 = vmatpush2.msra.mxu0 0.0
    %891 = vmatprep.subr.mxu0 0.0
    %892 = vmatpush2.msra.mxu0 0.0
    %893 = vmatprep.subr.mxu0 0.0
    %894 = vmatpush2.msra.mxu0 0.0
    %895 = vmatprep.subr.mxu0 0.0
    %896 = vmatpush2.msra.mxu0 0.0
    %897 = vmatprep.subr.mxu0 0.0
    %898 = vmatpush2.msra.mxu0 0.0
    %899 = vmatprep.subr.mxu0 0.0
    %900 = vmatpush2.msra.mxu0 0.0
    %901 = vmatprep.subr.mxu0 0.0
    %902 = vmatpush2.msra.mxu0 0.0
    %903 = vmatprep.subr.mxu0 0.0
    %904 = vmatpush2.msra.mxu0 0.0
    %905 = vmatprep.subr.mxu0 0.0
    %906 = vmatpush2.msra.mxu0 0.0
    %907 = vmatprep.subr.mxu0 0.0
    %908 = vmatpush2.msra.mxu0 0.0
    %909 = vmatprep.subr.mxu0 0.0
    %910 = vmatpush2.msra.mxu0 0.0
    %911 = vmatprep.subr.mxu0 0.0
    %912 = vmatpush2.msra.mxu0 0.0
    %913 = vmatprep.subr.mxu0 0.0
    %914 = vmatpush2.msra.mxu0 0.0
    %915 = vmatprep.mubr.f32.mxu0 0.0
    %v916 = vand.u32 %v587, 4294901760
    %v917 = vsub.f32 %v587, %v916
    %v918 = vand.u32 %v917, 4294901760
    %919 = vmatmul.mubr.f32.gmra.mxu0 %v918
    %v920 = vpop.f32.mrf.mxu0
    %v921 = vadd.f32 %v839, %v920
    %v922 = vpop.f32.mrf.mxu0
    %923 = vmatprep.mubr.f32.mxu0 0.0
    %v924 = vand.u32 %v590, 4294901760
    %v925 = vsub.f32 %v590, %v924
    %v926 = vand.u32 %v925, 4294901760
    %927 = vmatmul.mubr.f32.gmra.mxu0 %v926
    %v928 = vpop.f32.mrf.mxu0
    %v929 = vadd.f32 %v846, %v928
    %v930 = vpop.f32.mrf.mxu0
    %931 = vdwg.mxu0
    %932 = vmatprep.subr.mxu0 0.0
    %933 = vmatpush1.msra.mxu0 0.0
    %934 = vmatprep.subr.mxu0 0.0
    %935 = vmatpush1.msra.mxu0 0.0
    %936 = vmatprep.subr.mxu0 0.0
    %937 = vmatpush1.msra.mxu0 0.0
    %938 = vmatprep.subr.mxu0 0.0
    %939 = vmatpush1.msra.mxu0 0.0
    %940 = vmatprep.subr.mxu0 0.0
    %941 = vmatpush1.msra.mxu0 0.0
    %942 = vmatprep.subr.mxu0 0.0
    %943 = vmatpush1.msra.mxu0 0.0
    %944 = vmatprep.subr.mxu0 0.0
    %945 = vmatpush1.msra.mxu0 0.0
    %946 = vmatprep.subr.mxu0 0.0
    %947 = vmatpush1.msra.mxu0 0.0
    %948 = vmatprep.subr.mxu0 0.0
    %949 = vmatpush1.msra.mxu0 0.0
    %950 = vmatprep.subr.mxu0 0.0
    %951 = vmatpush1.msra.mxu0 0.0
    %952 = vmatprep.subr.mxu0 0.0
    %953 = vmatpush1.msra.mxu0 0.0
    %954 = vmatprep.subr.mxu0 0.0
    %955 = vmatpush1.msra.mxu0 0.0
    %956 = vmatprep.subr.mxu0 0.0
    %957 = vmatpush1.msra.mxu0 0.0
    %958 = vmatprep.subr.mxu0 0.0
    %959 = vmatpush1.msra.mxu0 0.0
    %960 = vmatprep.subr.mxu0 0.0
    %v961 = vand.u32 %v584, 4294901760
    %v962 = vsub.f32 %v584, %v961
    %v963 = vand.u32 %v962, 4294901760
    %964 = vmatpush1.msra.mxu0 %v963
    %965 = vmatprep.subr.mxu0 0.0
    %v966 = vand.u32 %v583, 4294901760
    %v967 = vsub.f32 %v583, %v966
    %v968 = vand.u32 %v967, 4294901760
    %969 = vmatpush1.msra.mxu0 %v968
    %970 = vmatprep.subr.mxu0 0.0
    %971 = vmatpush2.msra.mxu0 0.0
    %972 = vmatprep.subr.mxu0 0.0
    %973 = vmatpush2.msra.mxu0 0.0
    %974 = vmatprep.subr.mxu0 0.0
    %975 = vmatpush2.msra.mxu0 0.0
    %976 = vmatprep.subr.mxu0 0.0
    %977 = vmatpush2.msra.mxu0 0.0
    %978 = vmatprep.subr.mxu0 0.0
    %979 = vmatpush2.msra.mxu0 0.0
    %980 = vmatprep.subr.mxu0 0.0
    %981 = vmatpush2.msra.mxu0 0.0
    %982 = vmatprep.subr.mxu0 0.0
    %983 = vmatpush2.msra.mxu0 0.0
    %984 = vmatprep.subr.mxu0 0.0
    %985 = vmatpush2.msra.mxu0 0.0
    %986 = vmatprep.subr.mxu0 0.0
    %987 = vmatpush2.msra.mxu0 0.0
    %988 = vmatprep.subr.mxu0 0.0
    %989 = vmatpush2.msra.mxu0 0.0
    %990 = vmatprep.subr.mxu0 0.0
    %991 = vmatpush2.msra.mxu0 0.0
    %992 = vmatprep.subr.mxu0 0.0
    %993 = vmatpush2.msra.mxu0 0.0
    %994 = vmatprep.subr.mxu0 0.0
    %995 = vmatpush2.msra.mxu0 0.0
    %996 = vmatprep.subr.mxu0 0.0
    %997 = vmatpush2.msra.mxu0 0.0
    %998 = vmatprep.subr.mxu0 0.0
    %999 = vmatpush2.msra.mxu0 0.0
    %1000 = vmatprep.subr.mxu0 0.0
    %1001 = vmatpush2.msra.mxu0 0.0
    %1002 = vmatprep.mubr.f32.mxu0 0.0
    %v1003 = vand.u32 %v587, 4294901760
    %1004 = vmatmul.mubr.f32.gmra.mxu0 %v1003
    %v1005 = vpop.f32.mrf.mxu0
    %v1006 = vadd.f32 %v921, %v1005
    %v1007 = vpop.f32.mrf.mxu0
    %1008 = vmatprep.mubr.f32.mxu0 0.0
    %v1009 = vand.u32 %v590, 4294901760
    %1010 = vmatmul.mubr.f32.gmra.mxu0 %v1009
    %v1011 = vpop.f32.mrf.mxu0
    %v1012 = vadd.f32 %v929, %v1011
    %v1013 = vpop.f32.mrf.mxu0
    %1014 = vdwg.mxu0
    %1015 = vmatprep.subr.mxu0 0.0
    %1016 = vmatpush1.msra.mxu0 0.0
    %1017 = vmatprep.subr.mxu0 0.0
    %1018 = vmatpush1.msra.mxu0 0.0
    %1019 = vmatprep.subr.mxu0 0.0
    %1020 = vmatpush1.msra.mxu0 0.0
    %1021 = vmatprep.subr.mxu0 0.0
    %1022 = vmatpush1.msra.mxu0 0.0
    %1023 = vmatprep.subr.mxu0 0.0
    %1024 = vmatpush1.msra.mxu0 0.0
    %1025 = vmatprep.subr.mxu0 0.0
    %1026 = vmatpush1.msra.mxu0 0.0
    %1027 = vmatprep.subr.mxu0 0.0
    %1028 = vmatpush1.msra.mxu0 0.0
    %1029 = vmatprep.subr.mxu0 0.0
    %1030 = vmatpush1.msra.mxu0 0.0
    %1031 = vmatprep.subr.mxu0 0.0
    %1032 = vmatpush1.msra.mxu0 0.0
    %1033 = vmatprep.subr.mxu0 0.0
    %1034 = vmatpush1.msra.mxu0 0.0
    %1035 = vmatprep.subr.mxu0 0.0
    %1036 = vmatpush1.msra.mxu0 0.0
    %1037 = vmatprep.subr.mxu0 0.0
    %1038 = vmatpush1.msra.mxu0 0.0
    %1039 = vmatprep.subr.mxu0 0.0
    %1040 = vmatpush1.msra.mxu0 0.0
    %1041 = vmatprep.subr.mxu0 0.0
    %1042 = vmatpush1.msra.mxu0 0.0
    %1043 = vmatprep.subr.mxu0 0.0
    %v1044 = vand.u32 %v584, 4294901760
    %1045 = vmatpush1.msra.mxu0 %v1044
    %1046 = vmatprep.subr.mxu0 0.0
    %v1047 = vand.u32 %v583, 4294901760
    %1048 = vmatpush1.msra.mxu0 %v1047
    %1049 = vmatprep.subr.mxu0 0.0
    %1050 = vmatpush2.msra.mxu0 0.0
    %1051 = vmatprep.subr.mxu0 0.0
    %1052 = vmatpush2.msra.mxu0 0.0
    %1053 = vmatprep.subr.mxu0 0.0
    %1054 = vmatpush2.msra.mxu0 0.0
    %1055 = vmatprep.subr.mxu0 0.0
    %1056 = vmatpush2.msra.mxu0 0.0
    %1057 = vmatprep.subr.mxu0 0.0
    %1058 = vmatpush2.msra.mxu0 0.0
    %1059 = vmatprep.subr.mxu0 0.0
    %1060 = vmatpush2.msra.mxu0 0.0
    %1061 = vmatprep.subr.mxu0 0.0
    %1062 = vmatpush2.msra.mxu0 0.0
    %1063 = vmatprep.subr.mxu0 0.0
    %1064 = vmatpush2.msra.mxu0 0.0
    %1065 = vmatprep.subr.mxu0 0.0
    %1066 = vmatpush2.msra.mxu0 0.0
    %1067 = vmatprep.subr.mxu0 0.0
    %1068 = vmatpush2.msra.mxu0 0.0
    %1069 = vmatprep.subr.mxu0 0.0
    %1070 = vmatpush2.msra.mxu0 0.0
    %1071 = vmatprep.subr.mxu0 0.0
    %1072 = vmatpush2.msra.mxu0 0.0
    %1073 = vmatprep.subr.mxu0 0.0
    %1074 = vmatpush2.msra.mxu0 0.0
    %1075 = vmatprep.subr.mxu0 0.0
    %1076 = vmatpush2.msra.mxu0 0.0
    %1077 = vmatprep.subr.mxu0 0.0
    %1078 = vmatpush2.msra.mxu0 0.0
    %1079 = vmatprep.subr.mxu0 0.0
    %1080 = vmatpush2.msra.mxu0 0.0
    %1081 = vmatprep.mubr.f32.mxu0 0.0
    %v1082 = vand.u32 %v587, 4294901760
    %1083 = vmatmul.mubr.f32.gmra.mxu0 %v1082
    %v1084 = vpop.f32.mrf.mxu0
    %v1085 = vadd.f32 %v1006, %v1084
    %v1086 = vpop.f32.mrf.mxu0
    %1087 = vmatprep.mubr.f32.mxu0 0.0
    %v1088 = vand.u32 %v590, 4294901760
    %1089 = vmatmul.mubr.f32.gmra.mxu0 %v1088
    %v1090 = vpop.f32.mrf.mxu0
    %v1091 = vadd.f32 %v1012, %v1090
    %v1092 = vpop.f32.mrf.mxu0
    %1093 = vdwg.mxu0
    %v1096 = vunpack.c.l.s4 1966171168
    %v1097 = vunpack.c.0.s8 %v1096
    %v1098 = vlaneseq
    %v1099 = vshrl.u32 %v1098, 7
    %v1100 = vsub.s32 %v1097, %v1099
    %v1101 = vrot.slane %v580, %v1100
    %v1102 = vcombine.high %v1101, %v1101
    %v1104 = vunpack.c.l.s4 1966171168
    %v1105 = vunpack.c.0.s8 %v1104
    %v1106 = vlaneseq
    %v1107 = vshrl.u32 %v1106, 7
    %v1108 = vsub.s32 %v1105, %v1107
    %v1109 = vrot.slane %v1101, %v1108
    %v1111 = vunpack.c.l.s4 1966171168
    %v1112 = vunpack.c.0.s8 %v1111
    %v1113 = vlaneseq
    %v1114 = vshrl.u32 %v1113, 7
    %v1115 = vsub.s32 %v1112, %v1114
    %v1116 = vrot.slane %v1102, %v1115
    %v1117 = vlaneseq
    %v1118 = vshrl.u32 %v1117, 7
    %v1119 = vsub.s32 0, %v1118
    %v1120 = vrot.slane %v1109, %v1119
    %v1121 = vlaneseq
    %v1122 = vshrl.u32 %v1121, 7
    %v1123 = vsub.s32 0, %v1122
    %v1124 = vrot.slane %v1116, %v1123
    %v1127 = vadd.f32 %v1085, %v1120
    %v1128 = vadd.f32 %v1091, %v1124
    %v1129 = vtanh.pop %v1127
    %v1130 = vtanh.pop %v1128
    %v1131 = vld [vmem:[%s5] sm:$0x1]
    %v1133 = vlaneseq
    %v1134 = vshrl.u32 %v1133, 7
    %v1135 = vsub.s32 0, %v1134
    %v1136 = vrot.slane %v1131, %v1135
    %v1138 = vmul.f32 %v1129, %v1136
    %v1139 = vmul.f32 %v1130, %v1136
    %v1140 = vsel %vm94, %v1138, 0.0
    %1141 = vadd.xlane.f32.xlu0 %v1140
    %v1142 = vpop.xlane.xlu0 %1141
    %v1143 = vsel %vm94, %v1139, 0.0
    %1144 = vadd.xlane.f32.xlu0 %v1143
    %v1145 = vpop.xlane.xlu0 %1144
    %v1146 = vrot.slane %v1142, 4
    %v1147 = vmax.f32 %v1142, %v1146
    %v1148 = vrot.slane %v1147, 2
    %v1149 = vmax.f32 %v1147, %v1148
    %v1150 = vrot.slane %v1149, 1
    %v1151 = vmax.f32 %v1149, %v1150
    %v1152 = vrot.slane %v1145, 4
    %v1153 = vmax.f32 %v1145, %v1152
    %v1154 = vrot.slane %v1153, 2
    %v1155 = vmax.f32 %v1153, %v1154
    %v1156 = vrot.slane %v1155, 1
    %v1157 = vmax.f32 %v1155, %v1156
    %v1158 = vsub.f32 %v1142, %v1151
    %v1159 = vsub.f32 %v1145, %v1157
    %v1160 = vmul.f32 %v1158, 1.442695
    %v1161 = vpow.pop %v1160
    %v1162 = vmul.f32 %v1159, 1.442695
    %v1163 = vpow.pop %v1162
    %v1164 = vrot.slane %v1161, 4
    %v1165 = vadd.f32 %v1161, %v1164
    %v1166 = vrot.slane %v1165, 2
    %v1167 = vadd.f32 %v1165, %v1166
    %v1168 = vrot.slane %v1167, 1
    %v1169 = vadd.f32 %v1167, %v1168
    %v1170 = vrot.slane %v1163, 4
    %v1171 = vadd.f32 %v1163, %v1170
    %v1172 = vrot.slane %v1171, 2
    %v1173 = vadd.f32 %v1171, %v1172
    %v1174 = vrot.slane %v1173, 1
    %v1175 = vadd.f32 %v1173, %v1174
    %v1176 = vrcp.pop %v1169
    %v1177 = vmul.f32 %v1161, %v1176
    %v1178 = vrcp.pop %v1175
    %v1179 = vmul.f32 %v1163, %v1178
    %v1180 = vmul.f32 %v1177, %v80
    %v1181 = vmul.f32 %v1179, %v81
    %v1182 = vsel %vm585, %v1180, 0.0
    %v1183 = vrot.slane %v1182, 4
    %v1184 = vadd.f32 %v1182, %v1183
    %v1185 = vrot.slane %v1184, 2
    %v1186 = vadd.f32 %v1184, %v1185
    %v1187 = vrot.slane %v1186, 1
    %v1188 = vadd.f32 %v1186, %v1187
    %v1189 = vsel %vm585, %v1181, 0.0
    %v1190 = vrot.slane %v1189, 4
    %v1191 = vadd.f32 %v1189, %v1190
    %v1192 = vrot.slane %v1191, 2
    %v1193 = vadd.f32 %v1191, %v1192
    %v1194 = vrot.slane %v1193, 1
    %v1195 = vadd.f32 %v1193, %v1194
    %vm1198 = vcmask 1041409
    %v1199 = vsel %vm1198, %v1195, %v1188
    %vm1201 = vcmask 123904
    %1202 = vst.msk [vmem:[#allocation10] sm:$0x3] %vm1201, %v1199
    %v1205 = vlaneseq
    %v1206 = vand.u32 %v1205, 127
    %v1207 = vlaneseq
    %v1208 = vshrl.u32 %v1207, 7
    %v1209 = vsub.s32 %v1206, %v1208
    %v1210 = vrot.slane %v1177, %v1209
    %v1211 = vlaneseq
    %v1212 = vshrl.u32 %v1211, 7
    %v1213 = vsub.s32 %v1206, %v1212
    %v1214 = vrot.slane %v1179, %v1213
    %v1215 = vsel %vm1198, %v1214, %v1210
    %vm1217 = vcmask 58368
    %1218 = vst.msk [vmem:[#allocation11] sm:$0x3] %vm1217, %v1215
    // Predicated region
    $region42: #{tpu_custom_call.1} parent=1 // pred_check
      _
    $region43: #{tpu_custom_call.1} parent=1 // pred_check_branch
      %1220 = sbr.rel (0) target = $region45
    $region44: #{tpu_custom_call.1} parent=1 // pred_region
      %s1222 = ssub.s32 32, 32
      %1223 = vsyncadd [#allocation4], %s1222
      %s1225 = sshll.u32 [#allocation10], 4
      %s1226 = int_to_ptr.vmem [resolvable:$true] %s1225
      %1228 = dma.vmem_to_hbm [thread:$0]  %s1226, 32, %s6, [#allocation4]
    $region45: #{tpu_custom_call.1} parent=1 // pred_fallthru
      _
    // Predicated region
    $region46: #{tpu_custom_call.1} parent=1 // pred_check
      _
    $region47: #{tpu_custom_call.1} parent=1 // pred_check_branch
      %1230 = sbr.rel (0) target = $region49
    $region48: #{tpu_custom_call.1} parent=1 // pred_region
      %s1232 = ssub.s32 32, 32
      %1233 = vsyncadd [#allocation12], %s1232
      %s1235 = sshll.u32 [#allocation11], 4
      %s1236 = int_to_ptr.vmem [resolvable:$true] %s1235
      %1238 = dma.vmem_to_hbm [thread:$0]  %s1236, 32, %s7, [#allocation12]
    $region49: #{tpu_custom_call.1} parent=1 // pred_fallthru
      _
    // Predicated region
    $region50: #{tpu_custom_call.1} parent=1 // pred_check
      _
    $region51: #{tpu_custom_call.1} parent=1 // pred_check_branch
      %1240 = sbr.rel (0) target = $region53
    $region52: #{tpu_custom_call.1} parent=1 // pred_region
      %1241 = dma.done [#allocation4], 32
    $region53: #{tpu_custom_call.1} parent=1 // pred_fallthru
      _
    // Predicated region
    $region54: #{tpu_custom_call.1} parent=1 // pred_check
      _
    $region55: #{tpu_custom_call.1} parent=1 // pred_check_branch
      %1243 = sbr.rel (0) target = $region57
    $region56: #{tpu_custom_call.1} parent=1 // pred_region
      %1244 = dma.done [#allocation12], 32
    $region57: #{tpu_custom_call.1} parent=1 // pred_fallthru
      _
    %1245 = vsyncpa [#allocation3], 1
    %1246 = vsyncpa [#allocation6], 1
    %1247 = vsyncpa [#allocation9], 1
    %1248 = vsyncpa [#allocation4], 1
    %1249 = vsyncpa [#allocation12], 1

</llo_original>
